<compile_context>
chip_gen: v5e
topology: v5e:2x2
jax: 0.10.0
libtpu: 0.0.40
codegen_flags: <defaults>
</compile_context>

<pallas_src>
import functools

import jax
import jax.numpy as jnp
from jax.experimental import pallas as pl
from jax.experimental.pallas import tpu as pltpu


def _cdiv(a, b):
    return (a + b - 1) // b


def _cnn_encoder_kernel(x_ref, w_ref, b_ref, o_ref, max_ref, *, K, TL, L, mask_l):
    """One (batch-tile, L-tile) grid step.

    x_ref  : (TB, TL + K - 1, Cin)  bf16  halo-windowed input rows
    w_ref  : (K, Cin, Cout_p)       bf16  conv weight (per-tap matrices)
    b_ref  : (1, Cout_p)            f32   bias
    o_ref  : (TB, Cout_p)           f32   pooled output (written on last L step)
    max_ref: (TB, Cout_p)           f32   running-max scratch (persists across L steps)
    """
    li = pl.program_id(1)

    @pl.when(li == 0)
    def _init():
        # Post-ReLU values are >= 0, so 0 is a correct identity for the running max.
        max_ref[...] = jnp.zeros_like(max_ref)

    TB = x_ref.shape[0]
    Cin = x_ref.shape[2]
    Cout_p = o_ref.shape[1]

    # Conv1d as K shifted matmuls, folding (TB, TL) into the MXU M dimension.
    acc = jnp.zeros((TB * TL, Cout_p), jnp.float32)
    for k in range(K):  # K is small & static -> unrolled
        lhs = x_ref[:, k:k + TL, :].reshape(TB * TL, Cin)
        acc = acc + jnp.dot(lhs, w_ref[k], preferred_element_type=jnp.float32)

    acc = acc.reshape(TB, TL, Cout_p) + b_ref[...].reshape(1, 1, Cout_p)
    acc = jnp.maximum(acc, 0.0)  # ReLU BEFORE the pool (required for 0-init running max)

    if mask_l:
        # Drop padded (fake) sequence positions; 0 is neutral because values are post-ReLU.
        pos = li * TL + jax.lax.broadcasted_iota(jnp.int32, (1, TL, 1), 1)
        acc = jnp.where(pos < L, acc, 0.0)

    max_ref[...] = jnp.maximum(max_ref[...], jnp.max(acc, axis=1))

    @pl.when(li == pl.num_programs(1) - 1)
    def _finish():
        o_ref[...] = max_ref[...]


def cnn_encoder_forward(token, weight, bias, *, kernel_size, block_b=8, block_l=512):
    """token: (B, L, Cin) f32; weight: (Cout, Cin, K); bias: (Cout,) -> (B, Cout) f32."""
    B, L, Cin = token.shape
    Cout = weight.shape[0]
    K = kernel_size
    pad = (K - 1) // 2
    # TODO(synk): PyTorch Conv1d with padding=(K-1)//2 only matches 'same' for odd K; even K
    # changes the output length and is not handled here.

    # ---- tile sizes --------------------------------------------------------
    if block_b >= B:
        TB = B                               # single batch tile: block == full dim (always legal)
    else:
        TB = min(max(8, (block_b // 8) * 8), B)   # multiple of 8 for the (8,128) store rule
    B_tiles = _cdiv(B, TB)
    B_pad = B_tiles * TB
    TL = min(block_l, L)
    L_tiles = _cdiv(L, TL)
    L_core = L_tiles * TL
    Cout_p = _cdiv(Cout, 128) * 128          # lane-dense output / matmul N
    mask_l = (L_core != L)

    # ---- operand prep (bf16 cast fused with the halo-window gather) --------
    # 'same' left padding + (tile remainder + 'same' right padding) are the same zero rows.
    x_pad = jnp.pad(token, ((0, B_pad - B), (pad, L_core - L + pad), (0, 0)))
    win = jnp.arange(L_tiles)[:, None] * TL + jnp.arange(TL + 2 * pad)[None, :]
    x_win = jnp.take(x_pad, win, axis=1).astype(jnp.bfloat16)   # (B_pad, L_tiles, TL+K-1, Cin)

    w = jnp.transpose(weight, (2, 1, 0)).astype(jnp.bfloat16)   # (K, Cin, Cout)
    w = jnp.pad(w, ((0, 0), (0, 0), (0, Cout_p - Cout)))
    b = jnp.pad(bias.astype(jnp.float32), (0, Cout_p - Cout)).reshape(1, Cout_p)

    # ---- VMEM budget: double-buffered x & out + weights + bias + scratch ---
    x_tile_bytes = TB * (TL + 2 * pad) * Cin * 2
    est = 2 * x_tile_bytes + K * Cin * Cout_p * 2 + Cout_p * 4 + 3 * TB * Cout_p * 4
    vmem_limit = int(min(48 << 20, max(24 << 20, 4 * est)))     # fits v7x, raises v5e default

    kernel = functools.partial(_cnn_encoder_kernel, K=K, TL=TL, L=L, mask_l=mask_l)

    out = pl.pallas_call(
        kernel,
        out_shape=jax.ShapeDtypeStruct((B_pad, Cout_p), jnp.float32),
        grid_spec=pltpu.PrefetchScalarGridSpec(
            num_scalar_prefetch=0,
            grid=(B_tiles, L_tiles),          # reduction (max) axis last
            in_specs=[
                pl.BlockSpec((TB, None, TL + 2 * pad, Cin), lambda bi, li: (bi, li, 0, 0)),
                pl.BlockSpec((K, Cin, Cout_p), lambda bi, li: (0, 0, 0)),
                pl.BlockSpec((1, Cout_p), lambda bi, li: (0, 0)),
            ],
            out_specs=pl.BlockSpec((TB, Cout_p), lambda bi, li: (bi, 0)),
            scratch_shapes=[pltpu.VMEM((TB, Cout_p), jnp.float32)],
        ),
        compiler_params=pltpu.CompilerParams(
            dimension_semantics=("parallel", "arbitrary"),
            vmem_limit_bytes=vmem_limit,
        ),
    )(x_win, w, b)
    return out[:B, :Cout]


def init_params(key, input_dim, hidden_dim, kernel_size):
    """Deterministic init matching CNNEncoder.__init__ shapes.

    Weight: xavier_normal_ with gain = calculate_gain('relu') = sqrt(2).
    Bias:   PyTorch Conv1d default uniform(-1/sqrt(fan_in), 1/sqrt(fan_in)).
    """
    kw, kb = jax.random.split(key)
    fan_in = input_dim * kernel_size
    fan_out = hidden_dim * kernel_size
    gain = jnp.sqrt(2.0)
    std = gain * jnp.sqrt(2.0 / (fan_in + fan_out))
    weight = std * jax.random.normal(kw, (hidden_dim, input_dim, kernel_size), jnp.float32)
    bound = 1.0 / jnp.sqrt(fan_in)
    bias = jax.random.uniform(kb, (hidden_dim,), jnp.float32, -bound, bound)
    return weight, bias


def _reference(token, weight, bias, kernel_size):
    """Plain-JAX f32 reference of relu(conv1d(x, 'same')) max-pooled over the sequence."""
    B, L, _ = token.shape
    Cout = weight.shape[0]
    pad = (kernel_size - 1) // 2
    xp = jnp.pad(token, ((0, 0), (pad, pad), (0, 0)))
    out = jnp.zeros((B, L, Cout), jnp.float32)
    for k in range(kernel_size):
        out = out + jnp.einsum("blc,co->blo", xp[:, k:k + L, :], weight[:, :, k].T)
    out = jnp.maximum(out + bias[None, None, :], 0.0)
    return jnp.max(out, axis=1)


if __name__ == "__main__":
    # Small shapes implied by the forward: token is (batch, seq_len, input_dim).
    B, L, input_dim, hidden_dim, kernel_size = 2, 8, 4, 32, 3

    key = jax.random.PRNGKey(0)
    k_tok, k_par = jax.random.split(key)
    token = jax.random.normal(k_tok, (B, L, input_dim), jnp.float32)
    weight, bias = init_params(k_par, input_dim, hidden_dim, kernel_size)

    ref = _reference(token, weight, bias, kernel_size)

    # Config 1: L split into 2 tiles -> exercises halo windows + running-max accumulation.
    fwd1 = jax.jit(functools.partial(cnn_encoder_forward, kernel_size=kernel_size,
                                     block_b=2, block_l=4))
    out1 = jax.block_until_ready(fwd1(token, weight, bias))

    # Config 2: L tile that does not divide L -> exercises the fake-position mask path.
    fwd2 = jax.jit(functools.partial(cnn_encoder_forward, kernel_size=kernel_size,
                                     block_b=2, block_l=5))
    out2 = jax.block_until_ready(fwd2(token, weight, bias))

    assert out1.shape == (B, hidden_dim)
    assert out2.shape == (B, hidden_dim)
    # bf16 matmul inputs with f32 accumulation -> loose-ish tolerance vs the f32 reference.
    assert jnp.allclose(out1, ref, atol=3e-2, rtol=3e-2)
    assert jnp.allclose(out2, ref, atol=3e-2, rtol=3e-2)

    print("KERNEL_OK")
</pallas_src>

<mosaic_0001>
module attributes {stable_mosaic.version = 11 : i64} {
  func.func @_cnn_encoder_kernel(%arg0: i32, %arg1: i32, %arg2: memref<2x1x6x4xbf16, #tpu.memory_space<vmem>>, %arg3: memref<3x4x128xbf16, #tpu.memory_space<vmem>>, %arg4: memref<1x128xf32, #tpu.memory_space<vmem>>, %arg5: memref<2x128xf32, #tpu.memory_space<vmem>>, %arg6: memref<2x128xf32, #tpu.memory_space<vmem>>) attributes {dimension_semantics = [#tpu.dimension_semantics<parallel>, #tpu.dimension_semantics<arbitrary>], iteration_bounds = array<i64: 1, 2>, scalar_prefetch = 0 : i64, scratch_operands = 1 : i64, tpu.core_type = #tpu.core_type<tc>, window_params = [{transform_indices = @transform_0, window_bounds = array<i64: 2, 1, 6, 4>}, {pipeline_mode = #tpu.pipeline_mode<synchronous>, transform_indices = @transform_1, window_bounds = array<i64: 3, 4, 128>}, {pipeline_mode = #tpu.pipeline_mode<synchronous>, transform_indices = @transform_2, window_bounds = array<i64: 1, 128>}, {transform_indices = @transform_3, window_bounds = array<i64: 2, 128>}]} {
    %c0_i32 = arith.constant 0 : i32
    %0 = arith.cmpi eq, %arg1, %c0_i32 : i32
    %1 = arith.extui %0 : i1 to i32
    %c0_i32_0 = arith.constant 0 : i32
    %2 = arith.cmpi ne, %1, %c0_i32_0 : i32
    scf.if %2 {
      %cst_31 = arith.constant 0.000000e+00 : f32
      %39 = vector.broadcast %cst_31 : f32 to vector<2x128xf32>
      %c0_32 = arith.constant 0 : index
      %c0_33 = arith.constant 0 : index
      %40 = vector.load %arg6[%c0_32, %c0_33] : memref<2x128xf32, #tpu.memory_space<vmem>>, vector<2x128xf32>
      tpu.vector_store %arg6[%c0_32, %c0_33], %39 {strides = array<i32>} : memref<2x128xf32, #tpu.memory_space<vmem>>, vector<2x128xf32>,
    } else {
    }
    %cst = arith.constant 0.000000e+00 : f32
    %3 = vector.broadcast %cst : f32 to vector<8x128xf32>
    %c0 = arith.constant 0 : index
    %c0_1 = arith.constant 0 : index
    %c0_2 = arith.constant 0 : index
    %c0_3 = arith.constant 0 : index
    %4 = vector.load %arg2[%c0, %c0_1, %c0_2, %c0_3] : memref<2x1x6x4xbf16, #tpu.memory_space<vmem>>, vector<2x1x4x4xbf16>
    %5 = vector.shape_cast %4 : vector<2x1x4x4xbf16> to vector<2x4x4xbf16>
    %6 = vector.shape_cast %5 : vector<2x4x4xbf16> to vector<8x4xbf16>
    %c0_4 = arith.constant 0 : index
    %c0_5 = arith.constant 0 : index
    %c0_6 = arith.constant 0 : index
    %7 = vector.load %arg3[%c0_4, %c0_5, %c0_6] : memref<3x4x128xbf16, #tpu.memory_space<vmem>>, vector<1x4x128xbf16>
    %8 = vector.shape_cast %7 : vector<1x4x128xbf16> to vector<4x128xbf16>
    %cst_7 = arith.constant dense<0.000000e+00> : vector<8x128xf32>
    %9 = tpu.matmul %6, %8, %cst_7 {dimension_numbers = #tpu.dot_dimension_numbers<[1], [0], [0], [1], [0, 0, 1, 1], [], []>} : vector<8x4xbf16>, vector<4x128xbf16>, vector<8x128xf32> -> vector<8x128xf32>
    %10 = arith.addf %3, %9 : vector<8x128xf32>
    %c0_8 = arith.constant 0 : index
    %c0_9 = arith.constant 0 : index
    %c1 = arith.constant 1 : index
    %c0_10 = arith.constant 0 : index
    %11 = vector.load %arg2[%c0_8, %c0_9, %c1, %c0_10] : memref<2x1x6x4xbf16, #tpu.memory_space<vmem>>, vector<2x1x4x4xbf16>
    %12 = vector.shape_cast %11 : vector<2x1x4x4xbf16> to vector<2x4x4xbf16>
    %13 = vector.shape_cast %12 : vector<2x4x4xbf16> to vector<8x4xbf16>
    %c1_11 = arith.constant 1 : index
    %c0_12 = arith.constant 0 : index
    %c0_13 = arith.constant 0 : index
    %14 = vector.load %arg3[%c1_11, %c0_12, %c0_13] : memref<3x4x128xbf16, #tpu.memory_space<vmem>>, vector<1x4x128xbf16>
    %15 = vector.shape_cast %14 : vector<1x4x128xbf16> to vector<4x128xbf16>
    %cst_14 = arith.constant dense<0.000000e+00> : vector<8x128xf32>
    %16 = tpu.matmul %13, %15, %cst_14 {dimension_numbers = #tpu.dot_dimension_numbers<[1], [0], [0], [1], [0, 0, 1, 1], [], []>} : vector<8x4xbf16>, vector<4x128xbf16>, vector<8x128xf32> -> vector<8x128xf32>
    %17 = arith.addf %10, %16 : vector<8x128xf32>
    %c0_15 = arith.constant 0 : index
    %c0_16 = arith.constant 0 : index
    %c2 = arith.constant 2 : index
    %c0_17 = arith.constant 0 : index
    %18 = vector.load %arg2[%c0_15, %c0_16, %c2, %c0_17] : memref<2x1x6x4xbf16, #tpu.memory_space<vmem>>, vector<2x1x4x4xbf16>
    %19 = vector.shape_cast %18 : vector<2x1x4x4xbf16> to vector<2x4x4xbf16>
    %20 = vector.shape_cast %19 : vector<2x4x4xbf16> to vector<8x4xbf16>
    %c2_18 = arith.constant 2 : index
    %c0_19 = arith.constant 0 : index
    %c0_20 = arith.constant 0 : index
    %21 = vector.load %arg3[%c2_18, %c0_19, %c0_20] : memref<3x4x128xbf16, #tpu.memory_space<vmem>>, vector<1x4x128xbf16>
    %22 = vector.shape_cast %21 : vector<1x4x128xbf16> to vector<4x128xbf16>
    %cst_21 = arith.constant dense<0.000000e+00> : vector<8x128xf32>
    %23 = tpu.matmul %20, %22, %cst_21 {dimension_numbers = #tpu.dot_dimension_numbers<[1], [0], [0], [1], [0, 0, 1, 1], [], []>} : vector<8x4xbf16>, vector<4x128xbf16>, vector<8x128xf32> -> vector<8x128xf32>
    %24 = arith.addf %17, %23 : vector<8x128xf32>
    %25 = vector.shape_cast %24 : vector<8x128xf32> to vector<2x4x128xf32>
    %c0_22 = arith.constant 0 : index
    %c0_23 = arith.constant 0 : index
    %26 = vector.load %arg4[%c0_22, %c0_23] : memref<1x128xf32, #tpu.memory_space<vmem>>, vector<1x128xf32>
    %27 = vector.shape_cast %26 : vector<1x128xf32> to vector<1x1x128xf32>
    %28 = vector.broadcast %27 : vector<1x1x128xf32> to vector<2x4x128xf32>
    %29 = arith.addf %25, %28 : vector<2x4x128xf32>
    %cst_24 = arith.constant 0.000000e+00 : f32
    %30 = vector.broadcast %cst_24 : f32 to vector<2x4x128xf32>
    %31 = arith.maximumf %29, %30 : vector<2x4x128xf32>
    %c0_25 = arith.constant 0 : index
    %c0_26 = arith.constant 0 : index
    %32 = vector.load %arg6[%c0_25, %c0_26] : memref<2x128xf32, #tpu.memory_space<vmem>>, vector<2x128xf32>
    %cst_27 = arith.constant dense<0xFF800000> : vector<2x128xf32>
    %33 = vector.multi_reduction <maximumf>, %31, %cst_27 [1] : vector<2x4x128xf32> to vector<2x128xf32>
    %34 = arith.maximumf %32, %33 : vector<2x128xf32>
    %c0_28 = arith.constant 0 : index
    %c0_29 = arith.constant 0 : index
    %35 = vector.load %arg6[%c0_28, %c0_29] : memref<2x128xf32, #tpu.memory_space<vmem>>, vector<2x128xf32>
    tpu.vector_store %arg6[%c0_28, %c0_29], %34 {strides = array<i32>} : memref<2x128xf32, #tpu.memory_space<vmem>>, vector<2x128xf32>,
    %c1_i32 = arith.constant 1 : i32
    %36 = arith.cmpi eq, %arg1, %c1_i32 : i32
    %37 = arith.extui %36 : i1 to i32
    %c0_i32_30 = arith.constant 0 : i32
    %38 = arith.cmpi ne, %37, %c0_i32_30 : i32
    scf.if %38 {
      %c0_31 = arith.constant 0 : index
      %c0_32 = arith.constant 0 : index
      %39 = vector.load %arg6[%c0_31, %c0_32] : memref<2x128xf32, #tpu.memory_space<vmem>>, vector<2x128xf32>
      %c0_33 = arith.constant 0 : index
      %c0_34 = arith.constant 0 : index
      %40 = vector.load %arg5[%c0_33, %c0_34] : memref<2x128xf32, #tpu.memory_space<vmem>>, vector<2x128xf32>
      tpu.vector_store %arg5[%c0_33, %c0_34], %39 {strides = array<i32>} : memref<2x128xf32, #tpu.memory_space<vmem>>, vector<2x128xf32>,
    } else {
    }
    return
  }
  func.func @transform_0(%arg0: i32, %arg1: i32) -> (i32, i32, i32, i32) {
    %c0_i32 = arith.constant 0 : i32
    %c0_i32_0 = arith.constant 0 : i32
    %c0_i32_1 = arith.constant 0 : i32
    return %arg0, %arg1, %c0_i32, %c0_i32_0 : i32, i32, i32, i32
  }
  func.func @transform_1(%arg0: i32, %arg1: i32) -> (i32, i32, i32) {
    %c0_i32 = arith.constant 0 : i32
    %c0_i32_0 = arith.constant 0 : i32
    %c0_i32_1 = arith.constant 0 : i32
    %c0_i32_2 = arith.constant 0 : i32
    return %c0_i32, %c0_i32_0, %c0_i32_1 : i32, i32, i32
  }
  func.func @transform_2(%arg0: i32, %arg1: i32) -> (i32, i32) {
    %c0_i32 = arith.constant 0 : i32
    %c0_i32_0 = arith.constant 0 : i32
    %c0_i32_1 = arith.constant 0 : i32
    return %c0_i32, %c0_i32_0 : i32, i32
  }
  func.func @transform_3(%arg0: i32, %arg1: i32) -> (i32, i32) {
    %c0_i32 = arith.constant 0 : i32
    %c0_i32_0 = arith.constant 0 : i32
    return %arg0, %c0_i32 : i32, i32
  }
}

</mosaic_0001>

<llo_original>
// kernel: cnn_encoder_forward.1
$region0: #{cnn_encoder_forward.1}
  #allocation0 [shape = 'u32[]', space=smem, size = 0x4, offset = 0x4, fixed_abs, tag = 'smem constant byte address 0x4 - core index']
  #allocation1 [shape = 'u32[72,128]{1,0:T(1,128)}', space=vmem, size = 0x9000, scoped, tag = 'internal scratch']
  #allocation2 [shape = 'f32[2,128]{1,0:T(2,128)}', space=vmem, size = 0x400, scoped, tag = 'scratch operand']
  %s0 = inlined_call_operand.vmem [shape: bf16[2,2,6,4], index: 0, kind: input, shape index: {}]
  %s1 = inlined_call_operand.vmem [shape: bf16[3,4,128], index: 1, kind: input, shape index: {}]
  %s2 = inlined_call_operand.vmem [shape: f32[1,128], index: 2, kind: input, shape index: {}]
  %s3 = inlined_call_operand.hbm [shape: f32[2,128], index: 3, kind: output, shape index: {}]
  %s4 = sld [smem:[#allocation0]]
  $region94: #{cnn_encoder_forward.1} parent=0
    _
  %s6 = ssub.s32 1, %s4
  %s7 = scalar_select 0, %s6, %s4
  $region1: #{cnn_encoder_forward.1} parent=0
    #allocation3 [shape = 'u8[8192]{0}', space=vmem, size = 0x2000, scoped, tag = 'input window, operand 0']
    #allocation4 [shape = 'u8[1024]{0}', space=vmem, size = 0x400, scoped, tag = 'output window, operand 0, single buffered']
    #allocation5 [shape = 's32[2]{0}', space=sflag, size = 0x8, scoped, tag = 'scoped memory for cnn_encoder_forward.1']
    %8 = vsyncpa [#allocation5], 0
    loop: start=0, step=1, limit=4
    $region2: #{cnn_encoder_forward.1} parent=1 // loop_pre_header
      _
    $region3: #{cnn_encoder_forward.1} parent=1 // loop_header
      %s10 = sphi 0, %s14
      %p11 = scmp.ge.s32.totalorder %s10, 4
      %s17 = sphi 0, %s29
      %s18 = sphi 0, %s25
      %s19 = sphi 0, %s17
      %s20 = sphi 0, %s18
      %s21 = sphi 0, %s19
      %s22 = sphi 0, %s20
      %s34 = sphi 0, %s36
      %s37 = sphi 0, %s34
      %s38 = sphi 0, %s37
      %s54 = sphi 0, %s38
      %s58 = sphi 0, %s58
      %s60 = sphi 0, %s58
      %s61 = sphi 0, %s60
      %s75 = sphi 0, %s61
      %s79 = sphi 0, %s79
      %s81 = sphi 0, %s79
      %s82 = sphi 0, %s81
      %s96 = sphi 0, %s82
      %s102 = sphi 0, %s104
      %s105 = sphi 0, %s102
      %s106 = sphi 0, %s105
      %s122 = sphi 0, %s106
    $region4: #{cnn_encoder_forward.1} parent=1 // loop_header_branch
      %13 = sbr.rel (%p11) target = $region8
    $region5: #{cnn_encoder_forward.1} parent=1 // loop_body
      %s15 = ssub.s32 %s10, 1
      %s16 = ssub.s32 %s10, 2
      %s23 = sadd.s32 1, %s18
      %p24 = scmp.ge.s32.totalorder %s23, 2
      %s25 = scalar_select %p24, 0, %s23
      %s26 = sadd.s32 1, %s17
      %s27 = scalar_select %p24, %s26, %s17
      %p28 = scmp.ge.s32.totalorder %s27, 1
      %s29 = scalar_select %p28, 0, %s27
      %s30 = ssub.s32 %s17, %s29
      %s31 = ssub.s32 %s18, %s25
      %s32 = sor.u32 %s30, %s31
      %p33 = scmp.eq.s32.totalorder %s32, 0
      %s35 = sadd.s32 %s34, 1
      %s36 = scalar_select %p33, %s34, %s35
      %p39 = pneg %p33
      %p40 = scmp.eq.s32.totalorder %s10, 1
      %p41 = por %p39, %p40
      %p42 = scmp.ne.s32.totalorder %s34, %s37
      %p43 = scmp.eq.s32.totalorder %s10, 0
      %p44 = por %p42, %p43
      %p45 = scmp.ne.s32.totalorder %s34, %s37
      %p46 = scmp.eq.s32.totalorder %s15, 1
      %p47 = por %p45, %p46
      %p48 = scmp.ne.s32.totalorder %s37, %s38
      %p49 = scmp.eq.s32.totalorder %s15, 0
      %p50 = por %p48, %p49
      %p51 = scmp.ne.s32.totalorder %s37, %s38
      %p52 = scmp.eq.s32.totalorder %s16, 1
      %p53 = por %p51, %p52
      %p55 = scmp.ne.s32.totalorder %s38, %s54
      %p56 = scmp.eq.s32.totalorder %s16, 0
      %p57 = por %p55, %p56
      %s59 = sadd.s32 %s58, 1
      %p62 = scmp.eq.s32.totalorder %s10, 1
      %p63 = scmp.ne.s32.totalorder %s58, %s60
      %p64 = scmp.eq.s32.totalorder %s10, 0
      %p65 = por %p63, %p64
      %p66 = scmp.ne.s32.totalorder %s58, %s60
      %p67 = scmp.eq.s32.totalorder %s15, 1
      %p68 = por %p66, %p67
      %p69 = scmp.ne.s32.totalorder %s60, %s61
      %p70 = scmp.eq.s32.totalorder %s15, 0
      %p71 = por %p69, %p70
      %p72 = scmp.ne.s32.totalorder %s60, %s61
      %p73 = scmp.eq.s32.totalorder %s16, 1
      %p74 = por %p72, %p73
      %p76 = scmp.ne.s32.totalorder %s61, %s75
      %p77 = scmp.eq.s32.totalorder %s16, 0
      %p78 = por %p76, %p77
      %s80 = sadd.s32 %s79, 1
      %p83 = scmp.eq.s32.totalorder %s10, 1
      %p84 = scmp.ne.s32.totalorder %s79, %s81
      %p85 = scmp.eq.s32.totalorder %s10, 0
      %p86 = por %p84, %p85
      %p87 = scmp.ne.s32.totalorder %s79, %s81
      %p88 = scmp.eq.s32.totalorder %s15, 1
      %p89 = por %p87, %p88
      %p90 = scmp.ne.s32.totalorder %s81, %s82
      %p91 = scmp.eq.s32.totalorder %s15, 0
      %p92 = por %p90, %p91
      %p93 = scmp.ne.s32.totalorder %s81, %s82
      %p94 = scmp.eq.s32.totalorder %s16, 1
      %p95 = por %p93, %p94
      %p97 = scmp.ne.s32.totalorder %s82, %s96
      %p98 = scmp.eq.s32.totalorder %s16, 0
      %p99 = por %p97, %p98
      %s100 = ssub.s32 %s17, %s29
      %p101 = scmp.eq.s32.totalorder %s100, 0
      %s103 = sadd.s32 %s102, 1
      %s104 = scalar_select %p101, %s102, %s103
      %p107 = pneg %p101
      %p108 = scmp.eq.s32.totalorder %s10, 1
      %p109 = por %p107, %p108
      %p110 = scmp.ne.s32.totalorder %s102, %s105
      %p111 = scmp.eq.s32.totalorder %s10, 0
      %p112 = por %p110, %p111
      %p113 = scmp.ne.s32.totalorder %s102, %s105
      %p114 = scmp.eq.s32.totalorder %s15, 1
      %p115 = por %p113, %p114
      %p116 = scmp.ne.s32.totalorder %s105, %s106
      %p117 = scmp.eq.s32.totalorder %s15, 0
      %p118 = por %p116, %p117
      %p119 = scmp.ne.s32.totalorder %s105, %s106
      %p120 = scmp.eq.s32.totalorder %s16, 1
      %p121 = por %p119, %p120
      %p123 = scmp.ne.s32.totalorder %s106, %s122
      %p124 = scmp.eq.s32.totalorder %s16, 0
      %p125 = por %p123, %p124
      %p126 = scmp.le.s32.totalorder 1, %s10
      %p127 = scmp.lt.s32.totalorder %s10, 3
      %p128 = pnand %p126, %p127
      %p129 = pneg %p128
      // Predicated region
      $region9: #{cnn_encoder_forward.1} parent=5 // pred_check
        _
      $region10: #{cnn_encoder_forward.1} parent=5 // pred_check_branch
        %131 = sbr.rel (%p128) target = $region12
      $region11: #{cnn_encoder_forward.1} parent=5 // pred_region
        %s132 = ssub.s32 %s10, 1
        // Predicated region
        $region13: #{cnn_encoder_forward.1} parent=11 // pred_check
          %p133 = pneg %p71
        $region14: #{cnn_encoder_forward.1} parent=11 // pred_check_branch
          %135 = sbr.rel (%p133) target = $region16
        $region15: #{cnn_encoder_forward.1} parent=11 // pred_region
          _
        $region16: #{cnn_encoder_forward.1} parent=11 // pred_fallthru
          _
        // Predicated region
        $region17: #{cnn_encoder_forward.1} parent=11 // pred_check
          %p136 = pneg %p92
        $region18: #{cnn_encoder_forward.1} parent=11 // pred_check_branch
          %138 = sbr.rel (%p136) target = $region20
        $region19: #{cnn_encoder_forward.1} parent=11 // pred_region
          _
        $region20: #{cnn_encoder_forward.1} parent=11 // pred_fallthru
          _
      $region12: #{cnn_encoder_forward.1} parent=5 // pred_fallthru
        _
      %p139 = scmp.lt.s32.totalorder %s10, 2
      // Predicated region
      $region21: #{cnn_encoder_forward.1} parent=5 // pred_check
        %p140 = pneg %p139
      $region22: #{cnn_encoder_forward.1} parent=5 // pred_check_branch
        %142 = sbr.rel (%p140) target = $region24
      $region23: #{cnn_encoder_forward.1} parent=5 // pred_region
        // Predicated region
        $region25: #{cnn_encoder_forward.1} parent=23 // pred_check
          %p143 = pneg %p44
        $region26: #{cnn_encoder_forward.1} parent=23 // pred_check_branch
          %145 = sbr.rel (%p143) target = $region28
        $region27: #{cnn_encoder_forward.1} parent=23 // pred_region
          %s146 = sand.u32 %s34, 1
          %s147 = sand.u32 %s34, 1
          %s148 = smul.addr %s147, 8
          %s149 = scalar_lea.vmem [#allocation3], %s148
          %s150 = smul.u32 2, %s17
          %s151 = smul.addr %s150, 2
          %s152 = sadd.s32 %s18, %s151
          %s153 = smul.addr %s152, 4
          %s154 = scalar_lea.vmem %s0, %s153
          // Predicated region
          $region29: #{cnn_encoder_forward.1} parent=27 // pred_check
            _
          $region30: #{cnn_encoder_forward.1} parent=27 // pred_check_branch
            %156 = sbr.rel (0) target = $region32
          $region31: #{cnn_encoder_forward.1} parent=27 // pred_region
            // Predicated region
            $region33: #{cnn_encoder_forward.1} parent=31 // pred_check
              _
            $region34: #{cnn_encoder_forward.1} parent=31 // pred_check_branch
              %158 = sbr.rel target = $region36
            $region35: #{cnn_encoder_forward.1} parent=31 // pred_region
              // Predicated region
              $region48: #{cnn_encoder_forward.1} parent=35 // pred_check
                _
              $region49: #{cnn_encoder_forward.1} parent=35 // pred_check_branch
                %176 = sbr.rel (0) target = $region51
              $region50: #{cnn_encoder_forward.1} parent=35 // pred_region
                loop: start=0, step=1, limit=1
                $region52: #{cnn_encoder_forward.1} parent=50 // loop_pre_header
                  _
                $region53: #{cnn_encoder_forward.1} parent=50 // loop_header
                  %s178 = sphi 0, %s182
                  %p179 = scmp.ge.s32.totalorder %s178, 1
                  %s183 = sphi %s154, %s154
                  %s184 = sphi %s149, %s149
                $region54: #{cnn_encoder_forward.1} parent=50 // loop_header_branch
                  %181 = sbr.rel (%p179) target = $region58
                $region55: #{cnn_encoder_forward.1} parent=50 // loop_body
                  _
                $region56: #{cnn_encoder_forward.1} parent=50 // loop_footer
                  %s182 = sadd.s32 1, %s178
                $region57: #{cnn_encoder_forward.1} parent=50 // loop_footer_branch
                  %177 = sbr.rel target = $region53
                $region58: #{cnn_encoder_forward.1} parent=50 // loop_exit
                  _
                %s186 = ssub.s32 16, 1
                loop: start=0, step=1, limit=1
                $region59: #{cnn_encoder_forward.1} parent=50 // loop_pre_header
                  _
                $region60: #{cnn_encoder_forward.1} parent=50 // loop_header
                  %s188 = sphi 0, %s192
                  %p189 = scmp.ge.s32.totalorder %s188, 1
                  %s193 = sphi %s154, %s154
                  %s194 = sphi %s149, %s149
                $region61: #{cnn_encoder_forward.1} parent=50 // loop_header_branch
                  %191 = sbr.rel (%p189) target = $region65
                $region62: #{cnn_encoder_forward.1} parent=50 // loop_body
                  %v195 = vld [vmem:[%s193] sm:%s186]
                  %196 = vst [vmem:[%s194] sm:%s186] %v195
                  %v197 = vld [vmem:[%s193 + $0x8] sm:%s186]
                  %198 = vst [vmem:[%s194 + $0x4] sm:%s186] %v197
                $region63: #{cnn_encoder_forward.1} parent=50 // loop_footer
                  %s192 = sadd.s32 1, %s188
                $region64: #{cnn_encoder_forward.1} parent=50 // loop_footer_branch
                  %187 = sbr.rel target = $region60
                $region65: #{cnn_encoder_forward.1} parent=50 // loop_exit
                  _
              $region51: #{cnn_encoder_forward.1} parent=35 // pred_fallthru
                _
            $region36: #{cnn_encoder_forward.1} parent=31 // pred_fallthru
              _
            // Predicated region
            $region37: #{cnn_encoder_forward.1} parent=31 // pred_check
              _
            $region38: #{cnn_encoder_forward.1} parent=31 // pred_check_branch
              %160 = sbr.rel (0) target = $region40
            $region39: #{cnn_encoder_forward.1} parent=31 // pred_region
              %s162 = ssub.s32 16, 1
              loop: start=0, step=1, limit=1
              $region41: #{cnn_encoder_forward.1} parent=39 // loop_pre_header
                _
              $region42: #{cnn_encoder_forward.1} parent=39 // loop_header
                %s164 = sphi 0, %s168
                %p165 = scmp.ge.s32.totalorder %s164, 1
                %s169 = sphi %s154, %s154
                %s170 = sphi %s149, %s149
              $region43: #{cnn_encoder_forward.1} parent=39 // loop_header_branch
                %167 = sbr.rel (%p165) target = $region47
              $region44: #{cnn_encoder_forward.1} parent=39 // loop_body
                %v171 = vld [vmem:[%s169] sm:%s162]
                %172 = vst [vmem:[%s170] sm:%s162] %v171
                %v173 = vld [vmem:[%s169 + $0x8] sm:%s162]
                %174 = vst [vmem:[%s170 + $0x4] sm:%s162] %v173
              $region45: #{cnn_encoder_forward.1} parent=39 // loop_footer
                %s168 = sadd.s32 1, %s164
              $region46: #{cnn_encoder_forward.1} parent=39 // loop_footer_branch
                %163 = sbr.rel target = $region42
              $region47: #{cnn_encoder_forward.1} parent=39 // loop_exit
                _
            $region40: #{cnn_encoder_forward.1} parent=31 // pred_fallthru
              _
          $region32: #{cnn_encoder_forward.1} parent=27 // pred_fallthru
            _
          %199 = vnop
        $region28: #{cnn_encoder_forward.1} parent=23 // pred_fallthru
          _
      $region24: #{cnn_encoder_forward.1} parent=5 // pred_fallthru
        _
      %p200 = scmp.le.s32.totalorder 1, %s10
      %p201 = scmp.lt.s32.totalorder %s10, 3
      %p202 = pnand %p200, %p201
      %p203 = pneg %p202
      // Predicated region
      $region66: #{cnn_encoder_forward.1} parent=5 // pred_check
        _
      $region67: #{cnn_encoder_forward.1} parent=5 // pred_check_branch
        %205 = sbr.rel (%p202) target = $region69
      $region68: #{cnn_encoder_forward.1} parent=5 // pred_region
        %s206 = ssub.s32 %s10, 1
        %s207 = sand.u32 %s37, 1
        %s208 = sand.u32 %s37, 1
        %s209 = smul.addr %s208, 8
        %s210 = scalar_lea.vmem [#allocation3], %s209
        // Predicated region
        $region70: #{cnn_encoder_forward.1} parent=68 // pred_check
          %p211 = pneg %p50
        $region71: #{cnn_encoder_forward.1} parent=68 // pred_check_branch
          %213 = sbr.rel (%p211) target = $region73
        $region72: #{cnn_encoder_forward.1} parent=68 // pred_region
          _
        $region73: #{cnn_encoder_forward.1} parent=68 // pred_fallthru
          _
        %s214 = sand.u32 %s37, 1
        %s215 = sand.u32 %s37, 1
        %s216 = smul.addr %s215, 8
        %s217 = scalar_lea.vmem [#allocation3], %s216
        %p218 = pneg %p50
        %p219 = pneg %p47
        %p220 = pneg %p71
        %p221 = pneg %p68
        %p222 = pneg %p92
        %p223 = pneg %p89
        %p224 = pneg %p118
        %p225 = pneg %p115
        %s226 = smul.u32 2, %s19
        %p228 = scmp.eq.s32.totalorder %s20, 0
        // Predicated region
        $region74: #{cnn_encoder_forward.1} parent=68 // pred_check
          %p229 = pneg %p228
        $region75: #{cnn_encoder_forward.1} parent=68 // pred_check_branch
          %231 = sbr.rel (%p229) target = $region77
        $region76: #{cnn_encoder_forward.1} parent=68 // pred_region
          %232 = vst [vmem:[#allocation2] sm:$0x3] 0.0
        $region77: #{cnn_encoder_forward.1} parent=68 // pred_fallthru
          _
        %v233 = vld [vmem:[%s210] sm:$0x3]
        %v234 = vld [vmem:[%s210 + $0x4] sm:$0x3]
        %v235 = vld [vmem:[%s1] sm:$0x3]
        %v236 = vld [vmem:[%s210] sm:$0x7]
        %v237 = vld [vmem:[%s210 + $0x4] sm:$0x7]
        %v240 = vrot.slane %v236, 2
        %v241 = vrot.slane %v237, 2
        %vm242 = vcmask 1041408
        %v245 = vsel %vm242, %v236, %v240
        %vm246 = vcmask 1043458
        %v247 = vsel %vm246, %v236, %v240
        %v249 = vrot.slane %v247, 2
        %v252 = vsel %vm242, %v237, %v241
        %v253 = vsel %vm246, %v237, %v241
        %v255 = vrot.slane %v253, 2
        %vm256 = vsmask.f32 1280
        %vm257 = vsmask.f32 3336
        %vm258 = vmor %vm256, %vm257
        %vm259 = vsmask.f32 5392
        %vm260 = vmor %vm258, %vm259
        %vm261 = vsmask.f32 7448
        %vm262 = vmor %vm260, %vm261
        %v263 = vshrl.u32 %v245, 16
        %v265 = vrot.slane %v263, 6
        %v266 = vshll.u32 %v245, 16
        %v268 = vrot.slane %v266, 7
        %v269 = vor.u32 %v265, %v268
        %v270 = vrot.slane %v269, 2
        %v272 = vshll.u32 %v249, 16
        %v274 = vrot.slane %v272, 7
        %v275 = vsel %vm262, %v270, %v274
        %v276 = vshrl.u32 %v252, 16
        %v278 = vrot.slane %v276, 6
        %v279 = vshll.u32 %v252, 16
        %v281 = vrot.slane %v279, 7
        %v282 = vor.u32 %v278, %v281
        %v283 = vrot.slane %v282, 2
        %v285 = vshll.u32 %v255, 16
        %v287 = vrot.slane %v285, 7
        %v288 = vsel %vm262, %v283, %v287
        %s289 = scalar_lea.vmem %s1, 2
        %v290 = vld [vmem:[%s289] sm:$0x3]
        %292 = vst [vmem:[#allocation1] ss:$4 sm:$0xff] %v275
        %s294 = scalar_lea.vmem [#allocation1], 1
        %295 = vst [vmem:[%s294] ss:$4 sm:$0xff] %v288
        %v296 = vld.sshfl [vmem:[#allocation1] sm:$0xff pattern:$0x73625140]
        %vm297 = vcmask 31744
        %v298 = vsel %vm297, %v296, 0
        %v301 = vsel %vm242, %v290, 0
        %303 = vmatpush.bf16.msra.mxu0 0
        %304 = vmatpush.bf16.msra.mxu0 0
        %305 = vmatpush.bf16.msra.mxu0 0
        %306 = vmatpush.bf16.msra.mxu0 0
        %307 = vmatpush.bf16.msra.mxu0 0
        %308 = vmatpush.bf16.msra.mxu0 0
        %309 = vmatpush.bf16.msra.mxu0 0
        %310 = vmatpush.bf16.msra.mxu0 %v301
        %311 = vmatmul.bf16.gmra.mxu0 %v298
        %v312 = vpop.f32.mrf.mxu0
        %v313 = vadd.f32 0.0, %v312
        %v314 = vpop.f32.mrf.mxu0
        %315 = vdwg.mxu0
        %317 = vst [vmem:[#allocation1] ss:$4 sm:$0xff] %v233
        %s319 = scalar_lea.vmem [#allocation1], 1
        %320 = vst [vmem:[%s319] ss:$4 sm:$0xff] %v234
        %v321 = vld.sshfl [vmem:[#allocation1] sm:$0xff pattern:$0x73625140]
        %v322 = vsel %vm297, %v321, 0
        %v325 = vsel %vm242, %v235, 0
        %327 = vmatpush.bf16.msra.mxu0 0
        %328 = vmatpush.bf16.msra.mxu0 0
        %329 = vmatpush.bf16.msra.mxu0 0
        %330 = vmatpush.bf16.msra.mxu0 0
        %331 = vmatpush.bf16.msra.mxu0 0
        %332 = vmatpush.bf16.msra.mxu0 0
        %333 = vmatpush.bf16.msra.mxu0 0
        %334 = vmatpush.bf16.msra.mxu0 %v325
        %335 = vmatmul.bf16.gmra.mxu0 %v322
        %v336 = vpop.f32.mrf.mxu0
        %v337 = vadd.f32 %v313, %v336
        %v338 = vpop.f32.mrf.mxu0
        %339 = vdwg.mxu0
        %v340 = vld [vmem:[%s210] sm:$0x6]
        %v341 = vld [vmem:[%s210 + $0x4] sm:$0x6]
        %v344 = vrot.slane %v340, 2
        %v345 = vrot.slane %v341, 2
        %v348 = vsel %vm242, %v340, %v344
        %v350 = vsel %vm246, %v340, %v344
        %v352 = vrot.slane %v350, 2
        %v355 = vsel %vm242, %v341, %v345
        %v357 = vsel %vm246, %v341, %v345
        %v359 = vrot.slane %v357, 2
        %vm360 = vcmask 1040384
        %vm361 = vcmask 1042434
        %vm362 = vmor %vm360, %vm361
        %vm363 = vcmask 1044484
        %vm364 = vmor %vm362, %vm363
        %vm365 = vcmask 1046534
        %vm366 = vmor %vm364, %vm365
        %v367 = vrot.slane %v348, 7
        %v368 = vrot.slane %v367, 2
        %v369 = vrot.slane %v352, 7
        %v370 = vsel %vm366, %v368, %v369
        %v371 = vrot.slane %v355, 7
        %v372 = vrot.slane %v371, 2
        %v373 = vrot.slane %v359, 7
        %v374 = vsel %vm366, %v372, %v373
        %s375 = scalar_lea.vmem %s1, 4
        %v376 = vld [vmem:[%s375] sm:$0x3]
        %378 = vst [vmem:[#allocation1] ss:$4 sm:$0xff] %v370
        %s380 = scalar_lea.vmem [#allocation1], 1
        %381 = vst [vmem:[%s380] ss:$4 sm:$0xff] %v374
        %v382 = vld.sshfl [vmem:[#allocation1] sm:$0xff pattern:$0x73625140]
        %v383 = vsel %vm297, %v382, 0
        %v386 = vsel %vm242, %v376, 0
        %388 = vmatpush.bf16.msra.mxu0 0
        %389 = vmatpush.bf16.msra.mxu0 0
        %390 = vmatpush.bf16.msra.mxu0 0
        %391 = vmatpush.bf16.msra.mxu0 0
        %392 = vmatpush.bf16.msra.mxu0 0
        %393 = vmatpush.bf16.msra.mxu0 0
        %394 = vmatpush.bf16.msra.mxu0 0
        %395 = vmatpush.bf16.msra.mxu0 %v386
        %396 = vmatmul.bf16.gmra.mxu0 %v383
        %v397 = vpop.f32.mrf.mxu0
        %v398 = vadd.f32 0.0, %v397
        %v399 = vpop.f32.mrf.mxu0
        %400 = vdwg.mxu0
        %v401 = vadd.f32 %v337, %v398
        %v403 = vrot.slane %v401, 4
        %v405 = vld [vmem:[%s2] sm:$0x1]
        %v407 = vperm.slane %v405, 0
        %v409 = vadd.f32 %v401, %v407
        %v410 = vadd.f32 %v403, %v407
        %v411 = vmax.f32 %v409, 0.0
        %v412 = vmax.f32 %v410, 0.0
        %v413 = vld [vmem:[#allocation2] sm:$0x3]
        %vm414 = vcmask 1043456
        %v415 = vsel %vm414, %v411, -inf
        %v416 = vrot.slane %v415, 4
        %v417 = vmax.f32 %v415, %v416
        %v418 = vrot.slane %v417, 2
        %v419 = vmax.f32 %v417, %v418
        %v420 = vrot.slane %v419, 1
        %v421 = vmax.f32 %v419, %v420
        %v422 = vsel %vm414, %v412, -inf
        %v423 = vrot.slane %v422, 4
        %v424 = vmax.f32 %v422, %v423
        %v425 = vrot.slane %v424, 2
        %v426 = vmax.f32 %v424, %v425
        %v427 = vrot.slane %v426, 1
        %v428 = vmax.f32 %v426, %v427
        %vm431 = vcmask 1041409
        %v432 = vsel %vm431, %v428, %v421
        %v434 = vmax.f32 %v413, %v432
        %435 = vst [vmem:[#allocation2] sm:$0x3] %v434
        %p436 = scmp.eq.s32.totalorder %s20, 1
        // Predicated region
        $region78: #{cnn_encoder_forward.1} parent=68 // pred_check
          %p437 = pneg %p436
        $region79: #{cnn_encoder_forward.1} parent=68 // pred_check_branch
          %439 = sbr.rel (%p437) target = $region81
        $region80: #{cnn_encoder_forward.1} parent=68 // pred_region
          %v440 = vld [vmem:[#allocation2] sm:$0x3]
          %441 = vst [vmem:[#allocation4] sm:$0x3] %v440
        $region81: #{cnn_encoder_forward.1} parent=68 // pred_fallthru
          _
        // Predicated region
        $region82: #{cnn_encoder_forward.1} parent=68 // pred_check
          %p442 = pneg %p115
        $region83: #{cnn_encoder_forward.1} parent=68 // pred_check_branch
          %444 = sbr.rel (%p442) target = $region85
        $region84: #{cnn_encoder_forward.1} parent=68 // pred_region
          %446 = vsyncadd [#allocation5], 0
          %s447 = smul.addr %s19, 2
          %s448 = scalar_lea.hbm %s3, %s447
          %s450 = sshll.u32 [#allocation4], 4
          %s451 = int_to_ptr.vmem [resolvable:$true] %s450
          %s452 = sshll.u32 %s448, 4
          %s453 = int_to_ptr.hbm [resolvable:$true] %s452
          %455 = dma.vmem_to_hbm [thread:$0]  %s451, 32, %s453, [#allocation5]
        $region85: #{cnn_encoder_forward.1} parent=68 // pred_fallthru
          _
        // Predicated region
        $region86: #{cnn_encoder_forward.1} parent=68 // pred_check
          %p456 = pneg %p115
        $region87: #{cnn_encoder_forward.1} parent=68 // pred_check_branch
          %458 = sbr.rel (%p456) target = $region89
        $region88: #{cnn_encoder_forward.1} parent=68 // pred_region
          %460 = dma.done [#allocation5], 32
        $region89: #{cnn_encoder_forward.1} parent=68 // pred_fallthru
          _
      $region69: #{cnn_encoder_forward.1} parent=5 // pred_fallthru
        _
      %p461 = scmp.le.s32.totalorder 2, %s10
      // Predicated region
      $region90: #{cnn_encoder_forward.1} parent=5 // pred_check
        %p462 = pneg %p461
      $region91: #{cnn_encoder_forward.1} parent=5 // pred_check_branch
        %464 = sbr.rel (%p462) target = $region93
      $region92: #{cnn_encoder_forward.1} parent=5 // pred_region
        %s465 = ssub.s32 %s10, 2
      $region93: #{cnn_encoder_forward.1} parent=5 // pred_fallthru
        _
    $region6: #{cnn_encoder_forward.1} parent=1 // loop_footer
      %s14 = sadd.s32 1, %s10
    $region7: #{cnn_encoder_forward.1} parent=1 // loop_footer_branch
      %9 = sbr.rel target = $region3
    $region8: #{cnn_encoder_forward.1} parent=1 // loop_exit
      _
    %466 = vsyncpa [#allocation5], 1
    %s467 = scalar_lea.sflag [#allocation5], 1
    %468 = vsyncpa %s467, 1

</llo_original>
